<compile_context>
chip_gen: v6e
topology: v6e:2x2x1
jax: 0.10.0
libtpu: 0.0.40
codegen_flags: <defaults>
</compile_context>

<pallas_src>
import jax
import jax.numpy as jnp
from jax.experimental import pallas as pl
from jax.experimental.pallas import tpu as pltpu


def _weak_loc_kernel(x_ref, wc_ref, bc_ref, we_ref, be_ref,
                     ies_ref, raw_ref, evt_ref):
    x = x_ref[...]                                            # (T, B, D) f32

    # --- is_event_scores: Linear(D, 1) on the VPU (mul + lane reduce) ---
    wc = wc_ref[...]                                          # (1, D)
    s_tb = jnp.sum(x * wc[None, :, :], axis=-1) + bc_ref[0]   # (T, B)
    s = jnp.transpose(s_tb)                                   # (B, T), 1-vreg xpose
    ies_ref[...] = s

    # --- max over the sequence (leading) axis ---
    max_fused = jnp.max(x, axis=0)                            # (B, D)

    # --- raw_logits: Linear(D, 29) on the MXU, contracting w_evt's last dim ---
    raw = jnp.dot(max_fused, we_ref[...].T,
                  preferred_element_type=jnp.float32) + be_ref[...]   # (B, 29)
    raw_ref[...] = raw

    # --- logits = max_t( sigmoid(s_t)[:, None] * raw ) ---
    # sigmoid is strictly increasing & positive, so only the sequence extremes
    # matter; apply sigmoid to just those two (B, 1) vectors (EUP exp + approx
    # reciprocal), then the max over t is a single VPU jnp.maximum.  Exact.
    s_hi = jnp.max(s, axis=1, keepdims=True)                  # (B, 1)
    s_lo = jnp.min(s, axis=1, keepdims=True)                  # (B, 1)
    sig_hi = pl.reciprocal(1.0 + jnp.exp(-s_hi), approx=True)
    sig_lo = pl.reciprocal(1.0 + jnp.exp(-s_lo), approx=True)
    logits = jnp.maximum(sig_hi * raw, sig_lo * raw)          # (B, 29)

    # --- event_scores = softmax(logits, axis=-1), denominator on the EUP ---
    m = jnp.max(logits, axis=-1, keepdims=True)
    e = jnp.exp(logits - m)
    evt_ref[...] = e * pl.reciprocal(jnp.sum(e, axis=-1, keepdims=True),
                                     approx=True)


def weakly_localization_forward(fused_content, w_cls, b_cls, w_evt, b_evt):
    """fused_content: (T, B, D) seq-first.  Params in nn.Linear layout:
       w_cls: (1, D), b_cls: (1,), w_evt: (29, D), b_evt: (29,).
       Returns (is_event_scores (B, T), raw_logits (B, 29), event_scores (B, 29))."""
    T, B, D = fused_content.shape
    n_evt = w_evt.shape[0]

    # Only remaining wrapper op: a trivial (29,) -> (1, 29) bias reshape
    # (metadata-only; no transposes, no layout copies).
    b_evt_r = jnp.reshape(b_evt, (1, n_evt))

    vmem = pl.BlockSpec(memory_space=pltpu.MemorySpace.VMEM)
    smem = pl.BlockSpec(memory_space=pltpu.MemorySpace.SMEM)

    flops = (2 * B * T * D            # classifier mul + lane reduce
             + B * T * D              # max over the sequence axis
             + 2 * B * D * n_evt      # event matmul
             + 10 * B * n_evt         # maximum / softmax arithmetic
             + 4 * B)                 # sigmoid arithmetic at the extremes
    bytes_accessed = 4 * (T * B * D + D + 1 + n_evt * D + n_evt
                          + B * T + 2 * B * n_evt)

    is_event, raw_logits, event_scores = pl.pallas_call(
        _weak_loc_kernel,
        out_shape=(
            jax.ShapeDtypeStruct((B, T), jnp.float32),
            jax.ShapeDtypeStruct((B, n_evt), jnp.float32),
            jax.ShapeDtypeStruct((B, n_evt), jnp.float32),
        ),
        in_specs=[vmem, vmem, smem, vmem, vmem],
        out_specs=(vmem, vmem, vmem),
        cost_estimate=pl.CostEstimate(
            flops=flops,
            transcendentals=B * n_evt + 5 * B,   # softmax exps + 2 sigmoids + 3 recips
            bytes_accessed=bytes_accessed),
    )(fused_content, w_cls, b_cls, w_evt, b_evt_r)
    return is_event, raw_logits, event_scores


if __name__ == "__main__":
    # Small shapes consistent with the module: seq=8, batch=2, d_model=32.
    T, B, D, N_EVT = 8, 2, 32, 29

    key = jax.random.PRNGKey(0)
    kx, kwc, kbc, kwe, kbe = jax.random.split(key, 5)

    fused_content = jax.random.normal(kx, (T, B, D), dtype=jnp.float32)

    # nn.Linear-style init (uniform +-1/sqrt(fan_in)), PyTorch weight layout.
    bound = 1.0 / float(D) ** 0.5
    w_cls = jax.random.uniform(kwc, (1, D), jnp.float32, -bound, bound)
    b_cls = jax.random.uniform(kbc, (1,), jnp.float32, -bound, bound)
    w_evt = jax.random.uniform(kwe, (N_EVT, D), jnp.float32, -bound, bound)
    b_evt = jax.random.uniform(kbe, (N_EVT,), jnp.float32, -bound, bound)

    is_event, raw_logits, event_scores = weakly_localization_forward(
        fused_content, w_cls, b_cls, w_evt, b_evt)
    jax.block_until_ready((is_event, raw_logits, event_scores))

    # Pure-JAX reference mirroring the PyTorch forward.
    xc = jnp.transpose(fused_content, (1, 0, 2))                      # (B,T,D)
    ref_max = jnp.max(xc, axis=1)                                     # (B,D)
    ref_ies3 = jnp.einsum('btd,od->bto', xc, w_cls) + b_cls           # (B,T,1)
    ref_raw3 = (ref_max @ w_evt.T + b_evt)[:, None, :]                # (B,1,29)
    ref_fused = jax.nn.sigmoid(ref_ies3) * ref_raw3                   # (B,T,29)
    ref_logits = jnp.max(ref_fused, axis=1)                           # (B,29)
    ref_evt = jax.nn.softmax(ref_logits, axis=-1)                     # (B,29)
    ref_ies = jnp.squeeze(ref_ies3, axis=-1)                          # (B,T)
    ref_raw = jnp.squeeze(ref_raw3, axis=1)                           # (B,29)

    # is_event / raw_logits are exact-arithmetic paths; event_scores goes
    # through two approximate (EUP) reciprocals, so use a slightly looser
    # tolerance there (still tight for a 29-way probability distribution).
    assert jnp.allclose(is_event, ref_ies, atol=1e-5)
    assert jnp.allclose(raw_logits, ref_raw, atol=1e-5)
    assert jnp.allclose(event_scores, ref_evt, atol=2e-3, rtol=2e-3)

    print("KERNEL_OK")
</pallas_src>

<mosaic_0001>
module attributes {stable_mosaic.version = 11 : i64} {
  func.func @_weak_loc_kernel(%arg0: memref<8x2x32xf32, #tpu.memory_space<vmem>>, %arg1: memref<1x32xf32, #tpu.memory_space<vmem>>, %arg2: memref<1xf32, #tpu.memory_space<smem>>, %arg3: memref<29x32xf32, #tpu.memory_space<vmem>>, %arg4: memref<1x29xf32, #tpu.memory_space<vmem>>, %arg5: memref<2x8xf32, #tpu.memory_space<vmem>>, %arg6: memref<2x29xf32, #tpu.memory_space<vmem>>, %arg7: memref<2x29xf32, #tpu.memory_space<vmem>>) attributes {dimension_semantics = [], scalar_prefetch = 0 : i64, scratch_operands = 0 : i64, tpu.core_type = #tpu.core_type<tc>} {
    %c0 = arith.constant 0 : index
    %c0_0 = arith.constant 0 : index
    %c0_1 = arith.constant 0 : index
    %0 = vector.load %arg0[%c0, %c0_0, %c0_1] : memref<8x2x32xf32, #tpu.memory_space<vmem>>, vector<8x2x32xf32>
    %c0_2 = arith.constant 0 : index
    %c0_3 = arith.constant 0 : index
    %1 = vector.load %arg1[%c0_2, %c0_3] : memref<1x32xf32, #tpu.memory_space<vmem>>, vector<1x32xf32>
    %2 = vector.shape_cast %1 : vector<1x32xf32> to vector<1x1x32xf32>
    %3 = vector.broadcast %2 : vector<1x1x32xf32> to vector<8x2x32xf32>
    %4 = arith.mulf %0, %3 : vector<8x2x32xf32>
    %cst = arith.constant dense<0.000000e+00> : vector<8x2xf32>
    %5 = vector.multi_reduction <add>, %4, %cst [2] : vector<8x2x32xf32> to vector<8x2xf32>
    %c0_4 = arith.constant 0 : index
    %6 = memref.load %arg2[%c0_4] : memref<1xf32, #tpu.memory_space<smem>>
    %7 = vector.broadcast %6 : f32 to vector<8x2xf32>
    %8 = arith.addf %5, %7 : vector<8x2xf32>
    %9 = tpu.transpose %8, [1, 0] : vector<8x2xf32> -> vector<2x8xf32>
    %c0_5 = arith.constant 0 : index
    %c0_6 = arith.constant 0 : index
    %10 = vector.load %arg5[%c0_5, %c0_6] : memref<2x8xf32, #tpu.memory_space<vmem>>, vector<2x8xf32>
    tpu.vector_store %arg5[%c0_5, %c0_6], %9 {strides = array<i32>} : memref<2x8xf32, #tpu.memory_space<vmem>>, vector<2x8xf32>,
    %cst_7 = arith.constant dense<0xFF800000> : vector<2x32xf32>
    %11 = vector.multi_reduction <maximumf>, %0, %cst_7 [0] : vector<8x2x32xf32> to vector<2x32xf32>
    %c0_8 = arith.constant 0 : index
    %c0_9 = arith.constant 0 : index
    %12 = vector.load %arg3[%c0_8, %c0_9] : memref<29x32xf32, #tpu.memory_space<vmem>>, vector<29x32xf32>
    %13 = tpu.transpose %12, [1, 0] : vector<29x32xf32> -> vector<32x29xf32>
    %cst_10 = arith.constant dense<0.000000e+00> : vector<2x29xf32>
    %14 = tpu.matmul %11, %13, %cst_10 {dimension_numbers = #tpu.dot_dimension_numbers<[1], [0], [0], [1], [0, 0, 1, 1], [], []>} : vector<2x32xf32>, vector<32x29xf32>, vector<2x29xf32> -> vector<2x29xf32>
    %c0_11 = arith.constant 0 : index
    %c0_12 = arith.constant 0 : index
    %15 = vector.load %arg4[%c0_11, %c0_12] : memref<1x29xf32, #tpu.memory_space<vmem>>, vector<1x29xf32>
    %16 = vector.broadcast %15 : vector<1x29xf32> to vector<2x29xf32>
    %17 = arith.addf %14, %16 : vector<2x29xf32>
    %c0_13 = arith.constant 0 : index
    %c0_14 = arith.constant 0 : index
    %18 = vector.load %arg6[%c0_13, %c0_14] : memref<2x29xf32, #tpu.memory_space<vmem>>, vector<2x29xf32>
    tpu.vector_store %arg6[%c0_13, %c0_14], %17 {strides = array<i32>} : memref<2x29xf32, #tpu.memory_space<vmem>>, vector<2x29xf32>,
    %cst_15 = arith.constant dense<0xFF800000> : vector<2xf32>
    %19 = vector.multi_reduction <maximumf>, %9, %cst_15 [1] : vector<2x8xf32> to vector<2xf32>
    %20 = vector.shape_cast %19 : vector<2xf32> to vector<2x1xf32>
    %cst_16 = arith.constant dense<0x7F800000> : vector<2xf32>
    %21 = vector.multi_reduction <minimumf>, %9, %cst_16 [1] : vector<2x8xf32> to vector<2xf32>
    %22 = vector.shape_cast %21 : vector<2xf32> to vector<2x1xf32>
    %cst_17 = arith.constant 0.000000e+00 : f32
    %23 = vector.broadcast %cst_17 : f32 to vector<2x1xf32>
    %24 = arith.subf %23, %20 : vector<2x1xf32>
    %25 = math.exp %24 : vector<2x1xf32>
    %cst_18 = arith.constant 1.000000e+00 : f32
    %26 = vector.broadcast %cst_18 : f32 to vector<2x1xf32>
    %27 = arith.addf %26, %25 : vector<2x1xf32>
    %28 = tpu.reciprocal %27 {approx = true} : vector<2x1xf32> -> vector<2x1xf32>
    %cst_19 = arith.constant 0.000000e+00 : f32
    %29 = vector.broadcast %cst_19 : f32 to vector<2x1xf32>
    %30 = arith.subf %29, %22 : vector<2x1xf32>
    %31 = math.exp %30 : vector<2x1xf32>
    %cst_20 = arith.constant 1.000000e+00 : f32
    %32 = vector.broadcast %cst_20 : f32 to vector<2x1xf32>
    %33 = arith.addf %32, %31 : vector<2x1xf32>
    %34 = tpu.reciprocal %33 {approx = true} : vector<2x1xf32> -> vector<2x1xf32>
    %35 = vector.broadcast %28 : vector<2x1xf32> to vector<2x29xf32>
    %36 = arith.mulf %35, %17 : vector<2x29xf32>
    %37 = vector.broadcast %34 : vector<2x1xf32> to vector<2x29xf32>
    %38 = arith.mulf %37, %17 : vector<2x29xf32>
    %39 = arith.maximumf %36, %38 : vector<2x29xf32>
    %cst_21 = arith.constant dense<0xFF800000> : vector<2xf32>
    %40 = vector.multi_reduction <maximumf>, %39, %cst_21 [1] : vector<2x29xf32> to vector<2xf32>
    %41 = vector.shape_cast %40 : vector<2xf32> to vector<2x1xf32>
    %42 = vector.broadcast %41 : vector<2x1xf32> to vector<2x29xf32>
    %43 = arith.subf %39, %42 : vector<2x29xf32>
    %44 = math.exp %43 : vector<2x29xf32>
    %cst_22 = arith.constant dense<0.000000e+00> : vector<2xf32>
    %45 = vector.multi_reduction <add>, %44, %cst_22 [1] : vector<2x29xf32> to vector<2xf32>
    %46 = vector.shape_cast %45 : vector<2xf32> to vector<2x1xf32>
    %47 = tpu.reciprocal %46 {approx = true} : vector<2x1xf32> -> vector<2x1xf32>
    %48 = vector.broadcast %47 : vector<2x1xf32> to vector<2x29xf32>
    %49 = arith.mulf %44, %48 : vector<2x29xf32>
    %c0_23 = arith.constant 0 : index
    %c0_24 = arith.constant 0 : index
    %50 = vector.load %arg7[%c0_23, %c0_24] : memref<2x29xf32, #tpu.memory_space<vmem>>, vector<2x29xf32>
    tpu.vector_store %arg7[%c0_23, %c0_24], %49 {strides = array<i32>} : memref<2x29xf32, #tpu.memory_space<vmem>>, vector<2x29xf32>,
    return
  }
}

</mosaic_0001>

<llo_original>
// kernel: tpu_custom_call.1
$region0: #{tpu_custom_call.1}
  #allocation0 [shape = 'u32[]', space=smem, size = 0x4, offset = 0x4, fixed_abs, tag = 'smem constant byte address 0x4 - core index']
  #allocation1 [shape = 'u32[144,128]{1,0:T(1,128)}', space=vmem, size = 0x12000, scoped, tag = 'internal scratch']
  #allocation2 [shape = 'f32[1]{0:T(128)S(6)}', space=smem, size = 0x200, scoped, tag = 'scoped memory for tpu_custom_call.1']
  %s0 = inlined_call_operand.hbm [shape: f32[8,2,32], index: 0, kind: input, shape index: {}]
  %s1 = inlined_call_operand.vmem [shape: f32[1,32], index: 1, kind: input, shape index: {}]
  %s2 = inlined_call_operand.<no memory space> [shape: f32[1], index: 2, kind: input, shape index: {}]
  %s3 = inlined_call_operand.hbm [shape: f32[29,32], index: 3, kind: input, shape index: {}]
  %s4 = inlined_call_operand.vmem [shape: f32[1,29], index: 4, kind: input, shape index: {}]
  %s5 = inlined_call_operand.hbm [shape: f32[2,8], index: 5, kind: output, shape index: {0}]
  %s6 = inlined_call_operand.hbm [shape: f32[2,29], index: 6, kind: output, shape index: {1}]
  %s7 = inlined_call_operand.hbm [shape: f32[2,29], index: 7, kind: output, shape index: {2}]
  %8 = xla_tuple %s5, %s6, %s7
  %s9 = sld [smem:[#allocation0]]
  $region54: #{tpu_custom_call.1} parent=0
    _
  %s11 = ssub.s32 1, %s9
  %s12 = scalar_select 0, %s11, %s9
  %13 = sst [smem:[#allocation2]] %s2
  $region1: #{tpu_custom_call.1} parent=0
    #allocation3 [shape = 'u8[8192]{0}', space=vmem, size = 0x2000, scoped, tag = 'input window, operand 0, single buffered']
    #allocation4 [shape = 's32[1]{0}', space=sflag, size = 0x4, scoped, tag = 'scoped memory for tpu_custom_call.1']
    #allocation5 [shape = 's32[1]{0}', space=sflag, size = 0x4, scoped, tag = 'scoped memory for tpu_custom_call.1']
    #allocation6 [shape = 'u8[16384]{0}', space=vmem, size = 0x4000, scoped, tag = 'input window, operand 3, single buffered']
    #allocation7 [shape = 's32[1]{0}', space=sflag, size = 0x4, scoped, tag = 'scoped memory for tpu_custom_call.1']
    #allocation8 [shape = 'u8[1024]{0}', space=vmem, size = 0x400, scoped, tag = 'output window, operand 0, single buffered']
    #allocation9 [shape = 'u8[1024]{0}', space=vmem, size = 0x400, scoped, tag = 'output window, operand 1, single buffered']
    #allocation10 [shape = 's32[1]{0}', space=sflag, size = 0x4, scoped, tag = 'scoped memory for tpu_custom_call.1']
    #allocation11 [shape = 'u8[1024]{0}', space=vmem, size = 0x400, scoped, tag = 'output window, operand 2, single buffered']
    %14 = vsyncpa [#allocation4], 0
    %15 = vsyncpa [#allocation7], 0
    %16 = vsyncpa [#allocation5], 0
    %17 = vsyncpa [#allocation10], 0
    // Predicated region
    $region2: #{tpu_custom_call.1} parent=1 // pred_check
      _
    $region3: #{tpu_custom_call.1} parent=1 // pred_check_branch
      %19 = sbr.rel (0) target = $region5
    $region4: #{tpu_custom_call.1} parent=1 // pred_region
      %s21 = ssub.s32 256, 256
      %22 = vsyncadd [#allocation4], %s21
      %s23 = sshll.u32 [#allocation3], 4
      %s24 = int_to_ptr.vmem [resolvable:$true] %s23
      %29 = dma.hbm_to_vmem [thread:$0]  %s0, 256, %s24, [#allocation4], 32, 32, 2
    $region5: #{tpu_custom_call.1} parent=1 // pred_fallthru
      _
    // Predicated region
    $region6: #{tpu_custom_call.1} parent=1 // pred_check
      _
    $region7: #{tpu_custom_call.1} parent=1 // pred_check_branch
      %31 = sbr.rel (0) target = $region9
    $region8: #{tpu_custom_call.1} parent=1 // pred_region
      _
    $region9: #{tpu_custom_call.1} parent=1 // pred_fallthru
      _
    // Predicated region
    $region10: #{tpu_custom_call.1} parent=1 // pred_check
      _
    $region11: #{tpu_custom_call.1} parent=1 // pred_check_branch
      %33 = sbr.rel (0) target = $region13
    $region12: #{tpu_custom_call.1} parent=1 // pred_region
      _
    $region13: #{tpu_custom_call.1} parent=1 // pred_fallthru
      _
    // Predicated region
    $region14: #{tpu_custom_call.1} parent=1 // pred_check
      _
    $region15: #{tpu_custom_call.1} parent=1 // pred_check_branch
      %35 = sbr.rel (0) target = $region17
    $region16: #{tpu_custom_call.1} parent=1 // pred_region
      %s37 = ssub.s32 512, 512
      %38 = vsyncadd [#allocation7], %s37
      %s39 = sshll.u32 [#allocation6], 4
      %s40 = int_to_ptr.vmem [resolvable:$true] %s39
      %45 = dma.hbm_to_vmem [thread:$0]  %s3, 512, %s40, [#allocation7], 128, 128, 8
    $region17: #{tpu_custom_call.1} parent=1 // pred_fallthru
      _
    // Predicated region
    $region18: #{tpu_custom_call.1} parent=1 // pred_check
      _
    $region19: #{tpu_custom_call.1} parent=1 // pred_check_branch
      %47 = sbr.rel (0) target = $region21
    $region20: #{tpu_custom_call.1} parent=1 // pred_region
      _
    $region21: #{tpu_custom_call.1} parent=1 // pred_fallthru
      _
    // Predicated region
    $region22: #{tpu_custom_call.1} parent=1 // pred_check
      _
    $region23: #{tpu_custom_call.1} parent=1 // pred_check_branch
      %49 = sbr.rel (0) target = $region25
    $region24: #{tpu_custom_call.1} parent=1 // pred_region
      %50 = dma.done [#allocation4], 256
    $region25: #{tpu_custom_call.1} parent=1 // pred_fallthru
      _
    // Predicated region
    $region26: #{tpu_custom_call.1} parent=1 // pred_check
      _
    $region27: #{tpu_custom_call.1} parent=1 // pred_check_branch
      %52 = sbr.rel (0) target = $region29
    $region28: #{tpu_custom_call.1} parent=1 // pred_region
      %53 = dma.done [#allocation7], 512
    $region29: #{tpu_custom_call.1} parent=1 // pred_fallthru
      _
    %v54 = vld [vmem:[#allocation3] sm:$0x3]
    %v55 = vld [vmem:[#allocation3 + $0x2] sm:$0x3]
    %v56 = vld [vmem:[#allocation3 + $0x4] sm:$0x3]
    %v57 = vld [vmem:[#allocation3 + $0x6] sm:$0x3]
    %v58 = vld [vmem:[#allocation3 + $0x8] sm:$0x3]
    %v59 = vld [vmem:[#allocation3 + $0xa] sm:$0x3]
    %v60 = vld [vmem:[#allocation3 + $0xc] sm:$0x3]
    %v61 = vld [vmem:[#allocation3 + $0xe] sm:$0x3]
    %v62 = vld [vmem:[%s1] sm:$0x1]
    %v64 = vlaneseq
    %v65 = vshrl.u32 %v64, 7
    %v66 = vsub.s32 0, %v65
    %v67 = vrot.slane %v62, %v66
    %v69 = vmul.f32 %v54, %v67
    %v70 = vmul.f32 %v55, %v67
    %v71 = vmul.f32 %v56, %v67
    %v72 = vmul.f32 %v57, %v67
    %v73 = vmul.f32 %v58, %v67
    %v74 = vmul.f32 %v59, %v67
    %v75 = vmul.f32 %v60, %v67
    %v76 = vmul.f32 %v61, %v67
    %vm77 = vcmask 254976
    %v78 = vsel %vm77, %v69, 0.0
    %79 = vadd.xlane.f32.xlu0 %v78
    %v80 = vpop.xlane.xlu0 %79
    %v81 = vsel %vm77, %v70, 0.0
    %82 = vadd.xlane.f32.xlu0 %v81
    %v83 = vpop.xlane.xlu0 %82
    %v84 = vsel %vm77, %v71, 0.0
    %85 = vadd.xlane.f32.xlu0 %v84
    %v86 = vpop.xlane.xlu0 %85
    %v87 = vsel %vm77, %v72, 0.0
    %88 = vadd.xlane.f32.xlu0 %v87
    %v89 = vpop.xlane.xlu0 %88
    %v90 = vsel %vm77, %v73, 0.0
    %91 = vadd.xlane.f32.xlu0 %v90
    %v92 = vpop.xlane.xlu0 %91
    %v93 = vsel %vm77, %v74, 0.0
    %94 = vadd.xlane.f32.xlu0 %v93
    %v95 = vpop.xlane.xlu0 %94
    %v96 = vsel %vm77, %v75, 0.0
    %97 = vadd.xlane.f32.xlu0 %v96
    %v98 = vpop.xlane.xlu0 %97
    %v99 = vsel %vm77, %v76, 0.0
    %100 = vadd.xlane.f32.xlu0 %v99
    %v101 = vpop.xlane.xlu0 %100
    %s102 = sld [smem:[#allocation2]]
    %v103 = vstv %s102
    %v104 = vadd.f32 %v80, %v103
    %v105 = vadd.f32 %v83, %v103
    %v106 = vadd.f32 %v86, %v103
    %v107 = vadd.f32 %v89, %v103
    %v108 = vadd.f32 %v92, %v103
    %v109 = vadd.f32 %v95, %v103
    %v110 = vadd.f32 %v98, %v103
    %v111 = vadd.f32 %v101, %v103
    %v120 = vlaneseq
    %v121 = vand.u32 %v120, 127
    %v122 = vlaneseq
    %v123 = vshrl.u32 %v122, 7
    %v124 = vsub.s32 %v121, %v123
    %v125 = vrot.slane %v104, %v124
    %v126 = vlaneseq
    %v127 = vshrl.u32 %v126, 7
    %v128 = vsub.s32 %v121, %v127
    %v129 = vrot.slane %v105, %v128
    %v130 = vlaneseq
    %v131 = vshrl.u32 %v130, 7
    %v132 = vsub.s32 %v121, %v131
    %v133 = vrot.slane %v106, %v132
    %v134 = vlaneseq
    %v135 = vshrl.u32 %v134, 7
    %v136 = vsub.s32 %v121, %v135
    %v137 = vrot.slane %v107, %v136
    %v138 = vlaneseq
    %v139 = vshrl.u32 %v138, 7
    %v140 = vsub.s32 %v121, %v139
    %v141 = vrot.slane %v108, %v140
    %v142 = vlaneseq
    %v143 = vshrl.u32 %v142, 7
    %v144 = vsub.s32 %v121, %v143
    %v145 = vrot.slane %v109, %v144
    %v146 = vlaneseq
    %v147 = vshrl.u32 %v146, 7
    %v148 = vsub.s32 %v121, %v147
    %v149 = vrot.slane %v110, %v148
    %v150 = vlaneseq
    %v151 = vshrl.u32 %v150, 7
    %v152 = vsub.s32 %v121, %v151
    %v153 = vrot.slane %v111, %v152
    %vm154 = vcmask 1041409
    %v155 = vsel %vm154, %v129, %v125
    %vm156 = vcmask 1042434
    %v157 = vsel %vm156, %v133, %v155
    %vm158 = vcmask 1043459
    %v159 = vsel %vm158, %v137, %v157
    %vm160 = vcmask 1044484
    %v161 = vsel %vm160, %v141, %v159
    %vm162 = vcmask 1045509
    %v163 = vsel %vm162, %v145, %v161
    %vm164 = vcmask 1046534
    %v165 = vsel %vm164, %v149, %v163
    %vm166 = vcmask 1047559
    %v167 = vsel %vm166, %v153, %v165
    %169 = vxpose.xlu0.b32.start [1/16] %v167, 128
    %170 = vxpose.xlu0.b32.cont [2/16] 0.0, 128
    %171 = vxpose.xlu0.b32.cont [3/16] 0.0, 128
    %172 = vxpose.xlu0.b32.cont [4/16] 0.0, 128
    %173 = vxpose.xlu0.b32.cont [5/16] 0.0, 128
    %174 = vxpose.xlu0.b32.cont [6/16] 0.0, 128
    %175 = vxpose.xlu0.b32.cont [7/16] 0.0, 128
    %176 = vxpose.xlu0.b32.cont [8/16] 0.0, 128
    %177 = vxpose.xlu0.b32.cont [9/16] 0.0, 128
    %178 = vxpose.xlu0.b32.cont [10/16] 0.0, 128
    %179 = vxpose.xlu0.b32.cont [11/16] 0.0, 128
    %180 = vxpose.xlu0.b32.cont [12/16] 0.0, 128
    %181 = vxpose.xlu0.b32.cont [13/16] 0.0, 128
    %182 = vxpose.xlu0.b32.cont [14/16] 0.0, 128
    %183 = vxpose.xlu0.b32.cont [15/16] 0.0, 128
    %184 = vxpose.xlu0.b32.end [16/16] 0.0, 128
    %v185 = vpop.trf.xlu0
    %v186 = vpop.trf.xlu0
    %v187 = vpop.trf.xlu0
    %v188 = vpop.trf.xlu0
    %v189 = vpop.trf.xlu0
    %v190 = vpop.trf.xlu0
    %v191 = vpop.trf.xlu0
    %v192 = vpop.trf.xlu0
    %v193 = vpop.trf.xlu0
    %v194 = vpop.trf.xlu0
    %v195 = vpop.trf.xlu0
    %v196 = vpop.trf.xlu0
    %v197 = vpop.trf.xlu0
    %v198 = vpop.trf.xlu0
    %v199 = vpop.trf.xlu0
    %v200 = vpop.trf.xlu0
    %vm201 = vcmask 58368
    %202 = vst.msk [vmem:[#allocation8] sm:$0x3] %vm201, %v185
    %v203 = vsel %vm77, %v54, -inf
    %v204 = vsel %vm77, %v55, -inf
    %v205 = vsel %vm77, %v56, -inf
    %v206 = vsel %vm77, %v57, -inf
    %v207 = vsel %vm77, %v58, -inf
    %v208 = vmax.f32 %v203, %v207
    %v209 = vsel %vm77, %v59, -inf
    %v210 = vmax.f32 %v204, %v209
    %v211 = vsel %vm77, %v60, -inf
    %v212 = vmax.f32 %v205, %v211
    %v213 = vsel %vm77, %v61, -inf
    %v214 = vmax.f32 %v206, %v213
    %v215 = vmax.f32 %v208, %v210
    %v216 = vmax.f32 %v212, %v214
    %v217 = vmax.f32 %v215, %v216
    %v218 = vld [vmem:[#allocation6] sm:$0xff]
    %v219 = vld [vmem:[#allocation6 + $0x8] sm:$0xff]
    %v220 = vld [vmem:[#allocation6 + $0x10] sm:$0xff]
    %v221 = vld [vmem:[#allocation6 + $0x18] sm:$0x1f]
    %v222 = vld [vmem:[%s4] sm:$0x1]
    %v224 = vlaneseq
    %v225 = vshrl.u32 %v224, 7
    %v226 = vsub.s32 0, %v225
    %v227 = vrot.slane %v222, %v226
    %vm229 = vcmask 261120
    %v231 = vsel %vm229, %v217, 0
    %v234 = vsel %vm229, %v218, 0
    %v237 = vsel %vm229, %v219, 0
    %v240 = vsel %vm229, %v220, 0
    %v243 = vsel %vm229, %v221, 0
    %245 = vmatprep.subr.mxu0 0.0
    %246 = vmatpush1.xpose.msra.mxu0 0.0
    %247 = vmatprep.subr.mxu0 0.0
    %248 = vmatpush1.xpose.msra.mxu0 0.0
    %249 = vmatprep.subr.mxu0 0.0
    %250 = vmatpush1.xpose.msra.mxu0 0.0
    %251 = vmatprep.subr.mxu0 0.0
    %252 = vmatpush1.xpose.msra.mxu0 0.0
    %253 = vmatprep.subr.mxu0 0.0
    %254 = vmatpush1.xpose.msra.mxu0 0.0
    %255 = vmatprep.subr.mxu0 0.0
    %256 = vmatpush1.xpose.msra.mxu0 0.0
    %257 = vmatprep.subr.mxu0 0.0
    %258 = vmatpush1.xpose.msra.mxu0 0.0
    %259 = vmatprep.subr.mxu0 0.0
    %260 = vmatpush1.xpose.msra.mxu0 0.0
    %261 = vmatprep.subr.mxu0 0.0
    %262 = vmatpush1.xpose.msra.mxu0 0.0
    %263 = vmatprep.subr.mxu0 0.0
    %264 = vmatpush1.xpose.msra.mxu0 0.0
    %265 = vmatprep.subr.mxu0 0.0
    %266 = vmatpush1.xpose.msra.mxu0 0.0
    %267 = vmatprep.subr.mxu0 0.0
    %268 = vmatpush1.xpose.msra.mxu0 0.0
    %269 = vmatprep.subr.mxu0 0.0
    %270 = vmatpush1.xpose.msra.mxu0 %v243
    %271 = vmatprep.subr.mxu0 0.0
    %272 = vmatpush1.xpose.msra.mxu0 %v240
    %273 = vmatprep.subr.mxu0 0.0
    %274 = vmatpush1.xpose.msra.mxu0 %v237
    %275 = vmatprep.subr.mxu0 0.0
    %276 = vmatpush1.xpose.msra.mxu0 %v234
    %277 = vmatprep.subr.mxu0 0.0
    %278 = vmatpush2.xpose.msra.mxu0 0.0
    %279 = vmatprep.subr.mxu0 0.0
    %280 = vmatpush2.xpose.msra.mxu0 0.0
    %281 = vmatprep.subr.mxu0 0.0
    %282 = vmatpush2.xpose.msra.mxu0 0.0
    %283 = vmatprep.subr.mxu0 0.0
    %284 = vmatpush2.xpose.msra.mxu0 0.0
    %285 = vmatprep.subr.mxu0 0.0
    %286 = vmatpush2.xpose.msra.mxu0 0.0
    %287 = vmatprep.subr.mxu0 0.0
    %288 = vmatpush2.xpose.msra.mxu0 0.0
    %289 = vmatprep.subr.mxu0 0.0
    %290 = vmatpush2.xpose.msra.mxu0 0.0
    %291 = vmatprep.subr.mxu0 0.0
    %292 = vmatpush2.xpose.msra.mxu0 0.0
    %293 = vmatprep.subr.mxu0 0.0
    %294 = vmatpush2.xpose.msra.mxu0 0.0
    %295 = vmatprep.subr.mxu0 0.0
    %296 = vmatpush2.xpose.msra.mxu0 0.0
    %297 = vmatprep.subr.mxu0 0.0
    %298 = vmatpush2.xpose.msra.mxu0 0.0
    %299 = vmatprep.subr.mxu0 0.0
    %300 = vmatpush2.xpose.msra.mxu0 0.0
    %301 = vmatprep.subr.mxu0 0.0
    %302 = vmatpush2.xpose.msra.mxu0 0.0
    %303 = vmatprep.subr.mxu0 0.0
    %304 = vmatpush2.xpose.msra.mxu0 0.0
    %305 = vmatprep.subr.mxu0 0.0
    %306 = vmatpush2.xpose.msra.mxu0 0.0
    %307 = vmatprep.subr.mxu0 0.0
    %308 = vmatpush2.xpose.msra.mxu0 0.0
    %309 = vmatprep.mubr.f32.mxu0 0.0
    %310 = vmatmul.mubr.f32.gmra.mxu0 %v231
    %v311 = vpop.f32.mrf.mxu0
    %v312 = vadd.f32 %v227, %v311
    %v313 = vpop.f32.mrf.mxu0
    %314 = vdwg.mxu0
    %vm315 = vcmask 230400
    %316 = vst.msk [vmem:[#allocation9] sm:$0x3] %vm315, %v312
    %v317 = vsel %vm201, %v185, -inf
    %318 = vmax.xlane.f32.xlu0 %v317
    %v319 = vpop.xlane.xlu0 %318
    %v320 = vsel %vm201, %v185, inf
    %321 = vmin.xlane.f32.xlu0 %v320
    %v322 = vpop.xlane.xlu0 %321
    %v323 = vsub.f32 0.0, %v319
    %v324 = vmul.f32 %v323, 1.442695
    %v325 = vpow.pop %v324
    %v326 = vadd.f32 %v325, 1.0
    %v327 = vrcp.pop %v326
    %v328 = vsub.f32 0.0, %v322
    %v329 = vmul.f32 %v328, 1.442695
    %v330 = vpow.pop %v329
    %v331 = vadd.f32 %v330, 1.0
    %v332 = vrcp.pop %v331
    %v333 = vmul.f32 %v327, %v312
    %v334 = vmul.f32 %v332, %v312
    %v335 = vmax.f32 %v333, %v334
    %v336 = vsel %vm315, %v335, -inf
    %337 = vmax.xlane.f32.xlu0 %v336
    %v338 = vpop.xlane.xlu0 %337
    %v339 = vsub.f32 %v335, %v338
    %v340 = vmul.f32 %v339, 1.442695
    %v341 = vpow.pop %v340
    %v342 = vsel %vm315, %v341, 0.0
    %343 = vadd.xlane.f32.xlu0 %v342
    %v344 = vpop.xlane.xlu0 %343
    %v345 = vrcp.pop %v344
    %v346 = vmul.f32 %v341, %v345
    %347 = vst.msk [vmem:[#allocation11] sm:$0x3] %vm315, %v346
    // Predicated region
    $region30: #{tpu_custom_call.1} parent=1 // pred_check
      _
    $region31: #{tpu_custom_call.1} parent=1 // pred_check_branch
      %349 = sbr.rel (0) target = $region33
    $region32: #{tpu_custom_call.1} parent=1 // pred_region
      %s351 = ssub.s32 32, 32
      %352 = vsyncadd [#allocation5], %s351
      %s354 = sshll.u32 [#allocation8], 4
      %s355 = int_to_ptr.vmem [resolvable:$true] %s354
      %357 = dma.vmem_to_hbm [thread:$0]  %s355, 32, %s5, [#allocation5]
    $region33: #{tpu_custom_call.1} parent=1 // pred_fallthru
      _
    // Predicated region
    $region34: #{tpu_custom_call.1} parent=1 // pred_check
      _
    $region35: #{tpu_custom_call.1} parent=1 // pred_check_branch
      %359 = sbr.rel (0) target = $region37
    $region36: #{tpu_custom_call.1} parent=1 // pred_region
      %s361 = ssub.s32 32, 32
      %362 = vsyncadd [#allocation10], %s361
      %s364 = sshll.u32 [#allocation9], 4
      %s365 = int_to_ptr.vmem [resolvable:$true] %s364
      %367 = dma.vmem_to_hbm [thread:$0]  %s365, 32, %s6, [#allocation10]
    $region37: #{tpu_custom_call.1} parent=1 // pred_fallthru
      _
    // Predicated region
    $region38: #{tpu_custom_call.1} parent=1 // pred_check
      _
    $region39: #{tpu_custom_call.1} parent=1 // pred_check_branch
      %369 = sbr.rel (0) target = $region41
    $region40: #{tpu_custom_call.1} parent=1 // pred_region
      %s371 = ssub.s32 32, 32
      %372 = vsyncadd [#allocation10], %s371
      %s374 = sshll.u32 [#allocation11], 4
      %s375 = int_to_ptr.vmem [resolvable:$true] %s374
      %377 = dma.vmem_to_hbm [thread:$0]  %s375, 32, %s7, [#allocation10]
    $region41: #{tpu_custom_call.1} parent=1 // pred_fallthru
      _
    // Predicated region
    $region42: #{tpu_custom_call.1} parent=1 // pred_check
      _
    $region43: #{tpu_custom_call.1} parent=1 // pred_check_branch
      %379 = sbr.rel (0) target = $region45
    $region44: #{tpu_custom_call.1} parent=1 // pred_region
      %380 = dma.done [#allocation5], 32
    $region45: #{tpu_custom_call.1} parent=1 // pred_fallthru
      _
    // Predicated region
    $region46: #{tpu_custom_call.1} parent=1 // pred_check
      _
    $region47: #{tpu_custom_call.1} parent=1 // pred_check_branch
      %382 = sbr.rel (0) target = $region49
    $region48: #{tpu_custom_call.1} parent=1 // pred_region
      %383 = dma.done [#allocation10], 32
    $region49: #{tpu_custom_call.1} parent=1 // pred_fallthru
      _
    // Predicated region
    $region50: #{tpu_custom_call.1} parent=1 // pred_check
      _
    $region51: #{tpu_custom_call.1} parent=1 // pred_check_branch
      %385 = sbr.rel (0) target = $region53
    $region52: #{tpu_custom_call.1} parent=1 // pred_region
      %386 = dma.done [#allocation10], 32
    $region53: #{tpu_custom_call.1} parent=1 // pred_fallthru
      _
    %387 = vsyncpa [#allocation4], 1
    %388 = vsyncpa [#allocation7], 1
    %389 = vsyncpa [#allocation5], 1
    %390 = vsyncpa [#allocation10], 1

</llo_original>
